<compile_context>
chip_gen: v6e
topology: v6e:2x2x1
jax: 0.10.0
libtpu: 0.0.40
codegen_flags: <defaults>
</compile_context>

<pallas_src>
import jax
import jax.numpy as jnp
from jax.experimental import pallas as pl
from jax.experimental.pallas import tpu as pltpu

_MAX_TILE_ROWS = 4096  # (4096, 3) f32 pads to (4096, 128) -> ~2 MiB per VMEM buffer


def _identity_scale_kernel(scale_ref, f_ref, e_ref, fo_ref, eo_ref):
    """fo = scale * f ; eo = scale * e, each emitted in its native dtype."""
    s = scale_ref[0]  # f32 scalar from SMEM
    fo_ref[...] = (s * f_ref[...].astype(jnp.float32)).astype(fo_ref.dtype)
    # total_energy is a single grid-resident block: every grid step recomputes
    # and stores the same value (idempotent), so the HBM writeback happens once.
    eo_ref[...] = (s * e_ref[...].astype(jnp.float32)).astype(eo_ref.dtype)


def _round_up(n: int, m: int) -> int:
    return (n + m - 1) // m * m


def _choose_tile_rows(n_rows: int) -> int:
    if n_rows <= 8:
        return max(n_rows, 1)  # full extent -> always a legal block shape
    # Prefer >= 2 tiles so the "parallel" grid axis can shard across v7x's two
    # TensorCores, but cap the tile so double-buffered in+out fits scoped VMEM.
    half = _round_up(pl.cdiv(n_rows, 2), 8)
    return min(half, _MAX_TILE_ROWS)


@jax.jit
def _identity_scale(one, forces, total_energy):
    """Compute (one * forces, one * total_energy) with a single fused Pallas kernel."""
    one_arr = jnp.asarray(one, dtype=jnp.float32).reshape((1,))

    n_rows, n_cols = forces.shape
    tile_rows = _choose_tile_rows(n_rows)
    n_tiles = pl.cdiv(n_rows, tile_rows)

    forces_out, energy_out = pl.pallas_call(
        _identity_scale_kernel,
        out_shape=(
            jax.ShapeDtypeStruct(forces.shape, forces.dtype),
            jax.ShapeDtypeStruct(total_energy.shape, total_energy.dtype),
        ),
        grid=(n_tiles,),
        in_specs=[
            pl.BlockSpec(memory_space=pltpu.SMEM),                # scalar parameter
            pl.BlockSpec((tile_rows, n_cols), lambda i: (i, 0)),  # forces row-tile
            pl.BlockSpec(total_energy.shape, lambda i: (0, 0)),   # whole energy block
        ],
        out_specs=(
            pl.BlockSpec((tile_rows, n_cols), lambda i: (i, 0)),
            pl.BlockSpec(total_energy.shape, lambda i: (0, 0)),
        ),
        compiler_params=pltpu.CompilerParams(
            dimension_semantics=("parallel",),  # lets v7x shard row-tiles over 2 TCs
        ),
    )(one_arr, forces, total_energy)
    return forces_out, energy_out


class IdentityModelPallas:
    """JAX/Pallas port of the PyTorch IdentityModel."""

    def __init__(self):
        # torch.nn.Parameter(torch.as_tensor(1.0)) -> trainable scalar, kept dynamic.
        self.one = jnp.asarray(1.0, dtype=jnp.float32)

    def __call__(self, data: dict) -> dict:
        data = dict(data)
        one = self.one
        # Trace-time short-circuit: the fastest kernel is no kernel.  Only
        # possible when `one` is a static Python scalar (not the case for a
        # live nn.Parameter, so the Pallas path below is the normal path).
        if isinstance(one, (int, float)) and float(one) == 1.0:
            return data
        forces_out, energy_out = _identity_scale(
            one, data["forces"], data["total_energy"]
        )
        data["forces"] = forces_out
        data["total_energy"] = energy_out
        return data


if __name__ == "__main__":
    key = jax.random.PRNGKey(0)
    k_f, k_e = jax.random.split(key)

    n_atoms, n_graphs = 8, 2
    forces = jax.random.normal(k_f, (n_atoms, 3), dtype=jnp.float32)         # "1o"
    total_energy = jax.random.normal(k_e, (n_graphs, 1), dtype=jnp.float32)  # "0e"

    model = IdentityModelPallas()
    data_in = {"forces": forces, "total_energy": total_energy}
    data_out = model(data_in)

    jax.block_until_ready(data_out["forces"])
    jax.block_until_ready(data_out["total_energy"])

    # Correctness: with one == 1.0 the forward is an identity map.
    assert data_out["forces"].shape == forces.shape
    assert data_out["total_energy"].shape == total_energy.shape
    assert data_out["forces"].dtype == forces.dtype
    assert data_out["total_energy"].dtype == total_energy.dtype
    assert jnp.allclose(data_out["forces"], forces)
    assert jnp.allclose(data_out["total_energy"], total_energy)

    print("KERNEL_OK")
</pallas_src>

<mosaic_0001>
module attributes {stable_mosaic.version = 11 : i64} {
  func.func @_identity_scale_kernel(%arg0: i32, %arg1: memref<1xf32, #tpu.memory_space<smem>>, %arg2: memref<8x3xf32, #tpu.memory_space<vmem>>, %arg3: memref<2x1xf32, #tpu.memory_space<vmem>>, %arg4: memref<8x3xf32, #tpu.memory_space<vmem>>, %arg5: memref<2x1xf32, #tpu.memory_space<vmem>>) attributes {dimension_semantics = [#tpu.dimension_semantics<parallel>], iteration_bounds = array<i64: 1>, scalar_prefetch = 0 : i64, scratch_operands = 0 : i64, tpu.core_type = #tpu.core_type<tc>, window_params = [{transform_indices = @transform_0, window_bounds = array<i64: 1>}, {transform_indices = @transform_1, window_bounds = array<i64: 8, 3>}, {pipeline_mode = #tpu.pipeline_mode<synchronous>, transform_indices = @transform_2, window_bounds = array<i64: 2, 1>}, {transform_indices = @transform_3, window_bounds = array<i64: 8, 3>}, {pipeline_mode = #tpu.pipeline_mode<synchronous>, transform_indices = @transform_4, window_bounds = array<i64: 2, 1>}]} {
    %c0 = arith.constant 0 : index
    %0 = memref.load %arg1[%c0] : memref<1xf32, #tpu.memory_space<smem>>
    %c0_0 = arith.constant 0 : index
    %c0_1 = arith.constant 0 : index
    %1 = vector.load %arg2[%c0_0, %c0_1] : memref<8x3xf32, #tpu.memory_space<vmem>>, vector<8x3xf32>
    %2 = vector.broadcast %0 : f32 to vector<8x3xf32>
    %3 = arith.mulf %2, %1 : vector<8x3xf32>
    %c0_2 = arith.constant 0 : index
    %c0_3 = arith.constant 0 : index
    %4 = vector.load %arg4[%c0_2, %c0_3] : memref<8x3xf32, #tpu.memory_space<vmem>>, vector<8x3xf32>
    tpu.vector_store %arg4[%c0_2, %c0_3], %3 {strides = array<i32>} : memref<8x3xf32, #tpu.memory_space<vmem>>, vector<8x3xf32>,
    %c0_4 = arith.constant 0 : index
    %c0_5 = arith.constant 0 : index
    %5 = vector.load %arg3[%c0_4, %c0_5] : memref<2x1xf32, #tpu.memory_space<vmem>>, vector<2x1xf32>
    %6 = vector.broadcast %0 : f32 to vector<2x1xf32>
    %7 = arith.mulf %6, %5 : vector<2x1xf32>
    %c0_6 = arith.constant 0 : index
    %c0_7 = arith.constant 0 : index
    %8 = vector.load %arg5[%c0_6, %c0_7] : memref<2x1xf32, #tpu.memory_space<vmem>>, vector<2x1xf32>
    tpu.vector_store %arg5[%c0_6, %c0_7], %7 {strides = array<i32>} : memref<2x1xf32, #tpu.memory_space<vmem>>, vector<2x1xf32>,
    return
  }
  func.func @transform_0(%arg0: i32) -> i32 {
    %c0_i32 = arith.constant 0 : i32
    %c0_i32_0 = arith.constant 0 : i32
    return %c0_i32 : i32
  }
  func.func @transform_1(%arg0: i32) -> (i32, i32) {
    %c0_i32 = arith.constant 0 : i32
    %c0_i32_0 = arith.constant 0 : i32
    return %arg0, %c0_i32 : i32, i32
  }
  func.func @transform_2(%arg0: i32) -> (i32, i32) {
    %c0_i32 = arith.constant 0 : i32
    %c0_i32_0 = arith.constant 0 : i32
    %c0_i32_1 = arith.constant 0 : i32
    return %c0_i32, %c0_i32_0 : i32, i32
  }
  func.func @transform_3(%arg0: i32) -> (i32, i32) {
    %c0_i32 = arith.constant 0 : i32
    %c0_i32_0 = arith.constant 0 : i32
    return %arg0, %c0_i32 : i32, i32
  }
  func.func @transform_4(%arg0: i32) -> (i32, i32) {
    %c0_i32 = arith.constant 0 : i32
    %c0_i32_0 = arith.constant 0 : i32
    %c0_i32_1 = arith.constant 0 : i32
    return %c0_i32, %c0_i32_0 : i32, i32
  }
}

</mosaic_0001>

<llo_original>
// kernel: _identity_scale.1
$region0: #{_identity_scale.1}
  #allocation0 [shape = 'u32[]', space=smem, size = 0x4, offset = 0x4, fixed_abs, tag = 'smem constant byte address 0x4 - core index']
  #allocation1 [shape = 'u32[144,128]{1,0:T(1,128)}', space=vmem, size = 0x12000, scoped, tag = 'internal scratch']
  #allocation2 [shape = 'f32[1]{0:T(128)S(6)}', space=smem, size = 0x200, scoped, tag = 'scoped memory for _identity_scale.1']
  %s0 = inlined_call_operand.<no memory space> [shape: f32[1], index: 0, kind: input, shape index: {}]
  %s1 = inlined_call_operand.vmem [shape: f32[8,3], index: 1, kind: input, shape index: {}]
  %s2 = inlined_call_operand.vmem [shape: f32[2,1], index: 2, kind: input, shape index: {}]
  %s3 = inlined_call_operand.vmem [shape: f32[8,3], index: 3, kind: output, shape index: {0}]
  %s4 = inlined_call_operand.vmem [shape: f32[2,1], index: 4, kind: output, shape index: {1}]
  %5 = xla_tuple %s3, %s4
  %s6 = sld [smem:[#allocation0]]
  $region30: #{_identity_scale.1} parent=0
    _
  %s8 = ssub.s32 1, %s6
  %s9 = scalar_select 0, %s8, %s6
  %10 = sst [smem:[#allocation2]] %s0
  // Predicated region
  $region2: #{_identity_scale.1} parent=0 // pred_check
    _
  $region3: #{_identity_scale.1} parent=0 // pred_check_branch
    %12 = sbr.rel (0) target = $region5
  $region4: #{_identity_scale.1} parent=0 // pred_region
    _
  $region5: #{_identity_scale.1} parent=0 // pred_fallthru
    _
  // Predicated region
  $region6: #{_identity_scale.1} parent=0 // pred_check
    _
  $region7: #{_identity_scale.1} parent=0 // pred_check_branch
    %14 = sbr.rel (0) target = $region9
  $region8: #{_identity_scale.1} parent=0 // pred_region
    _
  $region9: #{_identity_scale.1} parent=0 // pred_fallthru
    _
  // Predicated region
  $region10: #{_identity_scale.1} parent=0 // pred_check
    _
  $region11: #{_identity_scale.1} parent=0 // pred_check_branch
    %16 = sbr.rel (0) target = $region13
  $region12: #{_identity_scale.1} parent=0 // pred_region
    _
  $region13: #{_identity_scale.1} parent=0 // pred_fallthru
    _
  %s17 = sld [smem:[#allocation2]]
  %v18 = vld [vmem:[%s1] sm:$0xff]
  %v19 = vstv %s17
  %v20 = vmul.f32 %v19, %v18
  %vm21 = vcmask 23552
  %22 = vst.msk [vmem:[%s3] sm:$0xff] %vm21, %v20
  %v23 = vld [vmem:[%s2] sm:$0x3]
  %v24 = vmul.f32 %v19, %v23
  %vm25 = vcmask 1024
  %26 = vst.msk [vmem:[%s4] sm:$0x3] %vm25, %v24
  // Predicated region
  $region14: #{_identity_scale.1} parent=0 // pred_check
    _
  $region15: #{_identity_scale.1} parent=0 // pred_check_branch
    %28 = sbr.rel (0) target = $region17
  $region16: #{_identity_scale.1} parent=0 // pred_region
    _
  $region17: #{_identity_scale.1} parent=0 // pred_fallthru
    _
  // Predicated region
  $region18: #{_identity_scale.1} parent=0 // pred_check
    _
  $region19: #{_identity_scale.1} parent=0 // pred_check_branch
    %30 = sbr.rel (0) target = $region21
  $region20: #{_identity_scale.1} parent=0 // pred_region
    _
  $region21: #{_identity_scale.1} parent=0 // pred_fallthru
    _
  // Predicated region
  $region22: #{_identity_scale.1} parent=0 // pred_check
    _
  $region23: #{_identity_scale.1} parent=0 // pred_check_branch
    %32 = sbr.rel (0) target = $region25
  $region24: #{_identity_scale.1} parent=0 // pred_region
    _
  $region25: #{_identity_scale.1} parent=0 // pred_fallthru
    _
  // Predicated region
  $region26: #{_identity_scale.1} parent=0 // pred_check
    _
  $region27: #{_identity_scale.1} parent=0 // pred_check_branch
    %34 = sbr.rel (0) target = $region29
  $region28: #{_identity_scale.1} parent=0 // pred_region
    _
  $region29: #{_identity_scale.1} parent=0 // pred_fallthru
    _

</llo_original>
